<compile_context>
chip_gen: v7x
topology: tpu7x:2x2x1
jax: 0.10.0
libtpu: 0.0.40
codegen_flags: <defaults>
</compile_context>

<pallas_src>
import jax
import jax.numpy as jnp
from jax.experimental import pallas as pl
from jax.experimental.pallas import tpu as pltpu

IN_FEATURES = 9
OUT_FEATURES = 2


def _round_up(n, m):
    return ((n + m - 1) // m) * m


def _logreg_kernel(x_ref, w_ref, b_ref, o_ref):
    """Fused linear + sigmoid for one batch tile.

    x_ref : (TILE, IN)  f32 VMEM  (batch-major, exactly the HBM layout of x)
    w_ref : (IN, OUT)   f32 VMEM  (transposed nn.Linear weight; tiny, resident)
    b_ref : (1, OUT)    f32 VMEM
    o_ref : (TILE, OUT) f32 VMEM
    """
    # One MXU dot replaces the previous 9x (1, BT) broadcast-FMA chain; the
    # MXU is otherwise idle and this removes ~8x of wasted VALU bundles.
    z = jnp.dot(x_ref[...], w_ref[...], preferred_element_type=jnp.float32)
    z = z + b_ref[...]
    # Exact sigmoid via a single EUP tanh: sigmoid(z) = 0.5 * (tanh(z/2) + 1).
    o_ref[...] = 0.5 * (jnp.tanh(0.5 * z) + 1.0)


def logistic_regression_forward(x, weight, bias, *, batch_tile=16384):
    """Forward pass of the LogisticRegression module: sigmoid(x @ W.T + b).

    x      : (B, 9)  f32
    weight : (2, 9)  f32 (PyTorch nn.Linear layout)
    bias   : (2,)    f32
    returns: (B, 2)  f32 probabilities
    """
    B = x.shape[0]
    x = x.astype(jnp.float32)

    # Batch rows sit on the sublane axis, the 9 features on the lane axis —
    # the same layout x already has in HBM, so no transpose/relayout of the
    # input or output is required.
    tile = min(batch_tile, _round_up(max(B, 1), 128))
    b_pad = _round_up(B, tile)
    x_p = x if b_pad == B else jnp.pad(x, ((0, b_pad - B), (0, 0)))
    # TODO(synk): for very large B not divisible by the tile, this pad re-copies
    # x once; a ragged (masked-edge) last block would avoid that copy.

    w_t = jnp.transpose(weight.astype(jnp.float32))          # (IN, OUT), 72 B
    b_row = bias.astype(jnp.float32).reshape(1, OUT_FEATURES)

    grid = (b_pad // tile,)

    cost = pl.CostEstimate(
        flops=2 * b_pad * IN_FEATURES * OUT_FEATURES + 8 * b_pad,
        transcendentals=OUT_FEATURES * b_pad,
        bytes_accessed=4 * b_pad * (IN_FEATURES + OUT_FEATURES),
    )

    out = pl.pallas_call(
        _logreg_kernel,
        out_shape=jax.ShapeDtypeStruct((b_pad, OUT_FEATURES), jnp.float32),
        grid=grid,
        in_specs=[
            pl.BlockSpec((tile, IN_FEATURES), lambda i: (i, 0)),       # x tile
            pl.BlockSpec((IN_FEATURES, OUT_FEATURES), lambda i: (0, 0)),  # W^T
            pl.BlockSpec((1, OUT_FEATURES), lambda i: (0, 0)),            # bias
        ],
        out_specs=pl.BlockSpec((tile, OUT_FEATURES), lambda i: (i, 0)),
        compiler_params=pltpu.CompilerParams(
            # "parallel": multi-tile runs split across v7x's two TensorCores;
            # harmless no-op on single-TC v5e/v6e.
            dimension_semantics=("parallel",),
            vmem_limit_bytes=48 * 1024 * 1024,
        ),
        cost_estimate=cost,
    )(x_p, w_t, b_row)

    return out[:B] if b_pad != B else out


if __name__ == "__main__":
    key = jax.random.PRNGKey(0)
    k_x, k_w, k_b, k_x2 = jax.random.split(key, 4)

    # Deterministic parameter init (PyTorch nn.Linear-style uniform bound).
    bound = 1.0 / (IN_FEATURES ** 0.5)
    weight = jax.random.uniform(
        k_w, (OUT_FEATURES, IN_FEATURES), minval=-bound, maxval=bound,
        dtype=jnp.float32)
    bias = jax.random.uniform(
        k_b, (OUT_FEATURES,), minval=-bound, maxval=bound, dtype=jnp.float32)

    # Case 1: batch=64 (matches the DataLoader batch_size in the reference).
    x_small = jax.random.normal(k_x, (64, IN_FEATURES), dtype=jnp.float32)
    probs_small = jax.block_until_ready(
        logistic_regression_forward(x_small, weight, bias))
    ref_small = jax.nn.sigmoid(x_small @ weight.T + bias)
    assert probs_small.shape == (64, OUT_FEATURES)
    assert jnp.allclose(probs_small, ref_small, atol=1e-5, rtol=1e-5)

    # Case 2: batch not a multiple of the tile, with a small tile to exercise
    # a multi-step grid + padded (discarded) edge rows.
    x_big = jax.random.normal(k_x2, (1100, IN_FEATURES), dtype=jnp.float32)
    probs_big = jax.block_until_ready(
        logistic_regression_forward(x_big, weight, bias, batch_tile=256))
    ref_big = jax.nn.sigmoid(x_big @ weight.T + bias)
    assert probs_big.shape == (1100, OUT_FEATURES)
    assert jnp.allclose(probs_big, ref_big, atol=1e-5, rtol=1e-5)

    # TODO(synk): CrossEntropyLoss / Adam training loop are host-side training
    # utilities outside the module's forward pass and are intentionally not
    # ported.

    print("KERNEL_OK")
</pallas_src>

<mosaic_0001>
module attributes {stable_mosaic.version = 11 : i64} {
  func.func @_logreg_kernel(%arg0: i32, %arg1: memref<128x9xf32, #tpu.memory_space<vmem>>, %arg2: memref<9x2xf32, #tpu.memory_space<vmem>>, %arg3: memref<1x2xf32, #tpu.memory_space<vmem>>, %arg4: memref<128x2xf32, #tpu.memory_space<vmem>>) attributes {dimension_semantics = [#tpu.dimension_semantics<parallel>], iteration_bounds = array<i64: 1>, scalar_prefetch = 0 : i64, scratch_operands = 0 : i64, tpu.core_type = #tpu.core_type<tc>, window_params = [{transform_indices = @transform_0, window_bounds = array<i64: 128, 9>}, {pipeline_mode = #tpu.pipeline_mode<synchronous>, transform_indices = @transform_1, window_bounds = array<i64: 9, 2>}, {pipeline_mode = #tpu.pipeline_mode<synchronous>, transform_indices = @transform_2, window_bounds = array<i64: 1, 2>}, {transform_indices = @transform_3, window_bounds = array<i64: 128, 2>}]} {
    %c0 = arith.constant 0 : index
    %c0_0 = arith.constant 0 : index
    %0 = vector.load %arg1[%c0, %c0_0] : memref<128x9xf32, #tpu.memory_space<vmem>>, vector<128x9xf32>
    %c0_1 = arith.constant 0 : index
    %c0_2 = arith.constant 0 : index
    %1 = vector.load %arg2[%c0_1, %c0_2] : memref<9x2xf32, #tpu.memory_space<vmem>>, vector<9x2xf32>
    %cst = arith.constant dense<0.000000e+00> : vector<128x2xf32>
    %2 = tpu.matmul %0, %1, %cst {dimension_numbers = #tpu.dot_dimension_numbers<[1], [0], [0], [1], [0, 0, 1, 1], [], []>} : vector<128x9xf32>, vector<9x2xf32>, vector<128x2xf32> -> vector<128x2xf32>
    %c0_3 = arith.constant 0 : index
    %c0_4 = arith.constant 0 : index
    %3 = vector.load %arg3[%c0_3, %c0_4] : memref<1x2xf32, #tpu.memory_space<vmem>>, vector<1x2xf32>
    %4 = vector.broadcast %3 : vector<1x2xf32> to vector<128x2xf32>
    %5 = arith.addf %2, %4 : vector<128x2xf32>
    %cst_5 = arith.constant 5.000000e-01 : f32
    %6 = vector.broadcast %cst_5 : f32 to vector<128x2xf32>
    %7 = arith.mulf %6, %5 : vector<128x2xf32>
    %8 = math.tanh %7 : vector<128x2xf32>
    %cst_6 = arith.constant 1.000000e+00 : f32
    %9 = vector.broadcast %cst_6 : f32 to vector<128x2xf32>
    %10 = arith.addf %8, %9 : vector<128x2xf32>
    %cst_7 = arith.constant 5.000000e-01 : f32
    %11 = vector.broadcast %cst_7 : f32 to vector<128x2xf32>
    %12 = arith.mulf %11, %10 : vector<128x2xf32>
    %c0_8 = arith.constant 0 : index
    %c0_9 = arith.constant 0 : index
    %13 = vector.load %arg4[%c0_8, %c0_9] : memref<128x2xf32, #tpu.memory_space<vmem>>, vector<128x2xf32>
    tpu.vector_store %arg4[%c0_8, %c0_9], %12 {strides = array<i32>} : memref<128x2xf32, #tpu.memory_space<vmem>>, vector<128x2xf32>,
    return
  }
  func.func @transform_0(%arg0: i32) -> (i32, i32) {
    %c0_i32 = arith.constant 0 : i32
    %c0_i32_0 = arith.constant 0 : i32
    return %arg0, %c0_i32 : i32, i32
  }
  func.func @transform_1(%arg0: i32) -> (i32, i32) {
    %c0_i32 = arith.constant 0 : i32
    %c0_i32_0 = arith.constant 0 : i32
    %c0_i32_1 = arith.constant 0 : i32
    return %c0_i32, %c0_i32_0 : i32, i32
  }
  func.func @transform_2(%arg0: i32) -> (i32, i32) {
    %c0_i32 = arith.constant 0 : i32
    %c0_i32_0 = arith.constant 0 : i32
    %c0_i32_1 = arith.constant 0 : i32
    return %c0_i32, %c0_i32_0 : i32, i32
  }
  func.func @transform_3(%arg0: i32) -> (i32, i32) {
    %c0_i32 = arith.constant 0 : i32
    %c0_i32_0 = arith.constant 0 : i32
    return %arg0, %c0_i32 : i32, i32
  }
}

</mosaic_0001>

<llo_original>
// kernel: tpu_custom_call.1
$region0: #{tpu_custom_call.1}
  #allocation0 [shape = 'u32[]', space=smem, size = 0x4, offset = 0x4, fixed_abs, tag = 'smem constant byte address 0x4 - core index']
  #allocation1 [shape = 'u32[144,128]{1,0:T(1,128)}', space=vmem, size = 0x12000, scoped, tag = 'internal scratch']
  %s0 = inlined_call_operand.vmem [shape: f32[128,9], index: 0, kind: input, shape index: {}]
  %s1 = inlined_call_operand.vmem [shape: f32[9,2], index: 1, kind: input, shape index: {}]
  %s2 = inlined_call_operand.vmem [shape: f32[1,2], index: 2, kind: input, shape index: {}]
  %s3 = inlined_call_operand.vmem [shape: f32[128,2], index: 3, kind: output, shape index: {}]
  %s4 = sld [smem:[#allocation0]]
  $region22: #{tpu_custom_call.1} parent=0
    _
  %s6 = ssub.s32 1, %s4
  %s7 = scalar_select 0, %s6, %s4
  // Predicated region
  $region2: #{tpu_custom_call.1} parent=0 // pred_check
    _
  $region3: #{tpu_custom_call.1} parent=0 // pred_check_branch
    %9 = sbr.rel (0) target = $region5
  $region4: #{tpu_custom_call.1} parent=0 // pred_region
    _
  $region5: #{tpu_custom_call.1} parent=0 // pred_fallthru
    _
  // Predicated region
  $region6: #{tpu_custom_call.1} parent=0 // pred_check
    _
  $region7: #{tpu_custom_call.1} parent=0 // pred_check_branch
    %11 = sbr.rel (0) target = $region9
  $region8: #{tpu_custom_call.1} parent=0 // pred_region
    _
  $region9: #{tpu_custom_call.1} parent=0 // pred_fallthru
    _
  // Predicated region
  $region10: #{tpu_custom_call.1} parent=0 // pred_check
    _
  $region11: #{tpu_custom_call.1} parent=0 // pred_check_branch
    %13 = sbr.rel (0) target = $region13
  $region12: #{tpu_custom_call.1} parent=0 // pred_region
    _
  $region13: #{tpu_custom_call.1} parent=0 // pred_fallthru
    _
  %v14 = vld [vmem:[%s0] sm:$0xff]
  %v15 = vld [vmem:[%s0 + $0x8] sm:$0xff]
  %v16 = vld [vmem:[%s0 + $0x10] sm:$0xff]
  %v17 = vld [vmem:[%s0 + $0x18] sm:$0xff]
  %v18 = vld [vmem:[%s0 + $0x20] sm:$0xff]
  %v19 = vld [vmem:[%s0 + $0x28] sm:$0xff]
  %v20 = vld [vmem:[%s0 + $0x30] sm:$0xff]
  %v21 = vld [vmem:[%s0 + $0x38] sm:$0xff]
  %v22 = vld [vmem:[%s0 + $0x40] sm:$0xff]
  %v23 = vld [vmem:[%s0 + $0x48] sm:$0xff]
  %v24 = vld [vmem:[%s0 + $0x50] sm:$0xff]
  %v25 = vld [vmem:[%s0 + $0x58] sm:$0xff]
  %v26 = vld [vmem:[%s0 + $0x60] sm:$0xff]
  %v27 = vld [vmem:[%s0 + $0x68] sm:$0xff]
  %v28 = vld [vmem:[%s0 + $0x70] sm:$0xff]
  %v29 = vld [vmem:[%s0 + $0x78] sm:$0xff]
  %v30 = vld [vmem:[%s1] sm:$0xff]
  %v31 = vld [vmem:[%s1 + $0x8] sm:$0x1]
  %v32 = vld [vmem:[%s2] sm:$0x1]
  %v34 = vlaneseq
  %v35 = vshrl.u32 %v34, 7
  %v36 = vsub.s32 0, %v35
  %v37 = vrot.slane %v32, %v36
  %vm39 = vcmask 72704
  %v41 = vsel %vm39, %v14, 0
  %v44 = vsel %vm39, %v15, 0
  %v47 = vsel %vm39, %v16, 0
  %v50 = vsel %vm39, %v17, 0
  %v53 = vsel %vm39, %v18, 0
  %v56 = vsel %vm39, %v19, 0
  %v59 = vsel %vm39, %v20, 0
  %v62 = vsel %vm39, %v21, 0
  %v65 = vsel %vm39, %v22, 0
  %v68 = vsel %vm39, %v23, 0
  %v71 = vsel %vm39, %v24, 0
  %v74 = vsel %vm39, %v25, 0
  %v77 = vsel %vm39, %v26, 0
  %v80 = vsel %vm39, %v27, 0
  %v83 = vsel %vm39, %v28, 0
  %v86 = vsel %vm39, %v29, 0
  %vm88 = vcmask 1040384
  %v90 = vsel %vm88, %v31, 0
  %92 = vmatprep.subr.mxu0 0.0
  %93 = vmatpush1.msra.mxu0 %v30
  %94 = vmatprep.subr.mxu0 0.0
  %95 = vmatpush1.msra.mxu0 %v90
  %96 = vmatprep.subr.mxu0 0.0
  %97 = vmatpush1.msra.mxu0 0.0
  %98 = vmatprep.subr.mxu0 0.0
  %99 = vmatpush1.msra.mxu0 0.0
  %100 = vmatprep.subr.mxu0 0.0
  %101 = vmatpush1.msra.mxu0 0.0
  %102 = vmatprep.subr.mxu0 0.0
  %103 = vmatpush1.msra.mxu0 0.0
  %104 = vmatprep.subr.mxu0 0.0
  %105 = vmatpush1.msra.mxu0 0.0
  %106 = vmatprep.subr.mxu0 0.0
  %107 = vmatpush1.msra.mxu0 0.0
  %108 = vmatprep.subr.mxu0 0.0
  %109 = vmatpush1.msra.mxu0 0.0
  %110 = vmatprep.subr.mxu0 0.0
  %111 = vmatpush1.msra.mxu0 0.0
  %112 = vmatprep.subr.mxu0 0.0
  %113 = vmatpush1.msra.mxu0 0.0
  %114 = vmatprep.subr.mxu0 0.0
  %115 = vmatpush1.msra.mxu0 0.0
  %116 = vmatprep.subr.mxu0 0.0
  %117 = vmatpush1.msra.mxu0 0.0
  %118 = vmatprep.subr.mxu0 0.0
  %119 = vmatpush1.msra.mxu0 0.0
  %120 = vmatprep.subr.mxu0 0.0
  %121 = vmatpush1.msra.mxu0 0.0
  %122 = vmatprep.subr.mxu0 0.0
  %123 = vmatpush1.msra.mxu0 0.0
  %124 = vmatprep.subr.mxu0 0.0
  %125 = vmatpush1.msra.mxu0 0.0
  %126 = vmatprep.subr.mxu0 0.0
  %127 = vmatpush1.msra.mxu0 0.0
  %128 = vmatprep.subr.mxu0 0.0
  %129 = vmatpush1.msra.mxu0 0.0
  %130 = vmatprep.subr.mxu0 0.0
  %131 = vmatpush1.msra.mxu0 0.0
  %132 = vmatprep.subr.mxu0 0.0
  %133 = vmatpush1.msra.mxu0 0.0
  %134 = vmatprep.subr.mxu0 0.0
  %135 = vmatpush1.msra.mxu0 0.0
  %136 = vmatprep.subr.mxu0 0.0
  %137 = vmatpush1.msra.mxu0 0.0
  %138 = vmatprep.subr.mxu0 0.0
  %139 = vmatpush1.msra.mxu0 0.0
  %140 = vmatprep.subr.mxu0 0.0
  %141 = vmatpush1.msra.mxu0 0.0
  %142 = vmatprep.subr.mxu0 0.0
  %143 = vmatpush1.msra.mxu0 0.0
  %144 = vmatprep.subr.mxu0 0.0
  %145 = vmatpush1.msra.mxu0 0.0
  %146 = vmatprep.subr.mxu0 0.0
  %147 = vmatpush1.msra.mxu0 0.0
  %148 = vmatprep.subr.mxu0 0.0
  %149 = vmatpush1.msra.mxu0 0.0
  %150 = vmatprep.subr.mxu0 0.0
  %151 = vmatpush1.msra.mxu0 0.0
  %152 = vmatprep.subr.mxu0 0.0
  %153 = vmatpush1.msra.mxu0 0.0
  %154 = vmatprep.subr.mxu0 0.0
  %155 = vmatpush1.msra.mxu0 0.0
  %156 = vmatprep.mubr.f32.mxu0 0.0
  %157 = vmatmul.mubr.f32.gmra.mrb[0].mxu0 %v41
  %v158 = vpop.f32.mrb[0].mxu0
  %v159 = vadd.f32 %v37, %v158
  %v160 = vpop.f32.mrb[0].mxu0
  %161 = vmatprep.mubr.f32.mxu0 0.0
  %162 = vmatmul.mubr.f32.gmra.mrb[0].mxu0 %v44
  %v163 = vpop.f32.mrb[0].mxu0
  %v164 = vadd.f32 %v37, %v163
  %v165 = vpop.f32.mrb[0].mxu0
  %166 = vmatprep.mubr.f32.mxu0 0.0
  %167 = vmatmul.mubr.f32.gmra.mrb[0].mxu0 %v47
  %v168 = vpop.f32.mrb[0].mxu0
  %v169 = vadd.f32 %v37, %v168
  %v170 = vpop.f32.mrb[0].mxu0
  %171 = vmatprep.mubr.f32.mxu0 0.0
  %172 = vmatmul.mubr.f32.gmra.mrb[0].mxu0 %v50
  %v173 = vpop.f32.mrb[0].mxu0
  %v174 = vadd.f32 %v37, %v173
  %v175 = vpop.f32.mrb[0].mxu0
  %176 = vmatprep.mubr.f32.mxu0 0.0
  %177 = vmatmul.mubr.f32.gmra.mrb[0].mxu0 %v53
  %v178 = vpop.f32.mrb[0].mxu0
  %v179 = vadd.f32 %v37, %v178
  %v180 = vpop.f32.mrb[0].mxu0
  %181 = vmatprep.mubr.f32.mxu0 0.0
  %182 = vmatmul.mubr.f32.gmra.mrb[0].mxu0 %v56
  %v183 = vpop.f32.mrb[0].mxu0
  %v184 = vadd.f32 %v37, %v183
  %v185 = vpop.f32.mrb[0].mxu0
  %186 = vmatprep.mubr.f32.mxu0 0.0
  %187 = vmatmul.mubr.f32.gmra.mrb[0].mxu0 %v59
  %v188 = vpop.f32.mrb[0].mxu0
  %v189 = vadd.f32 %v37, %v188
  %v190 = vpop.f32.mrb[0].mxu0
  %191 = vmatprep.mubr.f32.mxu0 0.0
  %192 = vmatmul.mubr.f32.gmra.mrb[0].mxu0 %v62
  %v193 = vpop.f32.mrb[0].mxu0
  %v194 = vadd.f32 %v37, %v193
  %v195 = vpop.f32.mrb[0].mxu0
  %196 = vmatprep.mubr.f32.mxu0 0.0
  %197 = vmatmul.mubr.f32.gmra.mrb[0].mxu0 %v65
  %v198 = vpop.f32.mrb[0].mxu0
  %v199 = vadd.f32 %v37, %v198
  %v200 = vpop.f32.mrb[0].mxu0
  %201 = vmatprep.mubr.f32.mxu0 0.0
  %202 = vmatmul.mubr.f32.gmra.mrb[0].mxu0 %v68
  %v203 = vpop.f32.mrb[0].mxu0
  %v204 = vadd.f32 %v37, %v203
  %v205 = vpop.f32.mrb[0].mxu0
  %206 = vmatprep.mubr.f32.mxu0 0.0
  %207 = vmatmul.mubr.f32.gmra.mrb[0].mxu0 %v71
  %v208 = vpop.f32.mrb[0].mxu0
  %v209 = vadd.f32 %v37, %v208
  %v210 = vpop.f32.mrb[0].mxu0
  %211 = vmatprep.mubr.f32.mxu0 0.0
  %212 = vmatmul.mubr.f32.gmra.mrb[0].mxu0 %v74
  %v213 = vpop.f32.mrb[0].mxu0
  %v214 = vadd.f32 %v37, %v213
  %v215 = vpop.f32.mrb[0].mxu0
  %216 = vmatprep.mubr.f32.mxu0 0.0
  %217 = vmatmul.mubr.f32.gmra.mrb[0].mxu0 %v77
  %v218 = vpop.f32.mrb[0].mxu0
  %v219 = vadd.f32 %v37, %v218
  %v220 = vpop.f32.mrb[0].mxu0
  %221 = vmatprep.mubr.f32.mxu0 0.0
  %222 = vmatmul.mubr.f32.gmra.mrb[0].mxu0 %v80
  %v223 = vpop.f32.mrb[0].mxu0
  %v224 = vadd.f32 %v37, %v223
  %v225 = vpop.f32.mrb[0].mxu0
  %226 = vmatprep.mubr.f32.mxu0 0.0
  %227 = vmatmul.mubr.f32.gmra.mrb[0].mxu0 %v83
  %v228 = vpop.f32.mrb[0].mxu0
  %v229 = vadd.f32 %v37, %v228
  %v230 = vpop.f32.mrb[0].mxu0
  %231 = vmatprep.mubr.f32.mxu0 0.0
  %232 = vmatmul.mubr.f32.gmra.mrb[0].mxu0 %v86
  %v233 = vpop.f32.mrb[0].mxu0
  %v234 = vadd.f32 %v37, %v233
  %v235 = vpop.f32.mrb[0].mxu0
  %236 = vdwg.mxu0
  %v237 = vmul.f32 %v159, 0.5
  %v238 = vmul.f32 %v164, 0.5
  %v239 = vmul.f32 %v169, 0.5
  %v240 = vmul.f32 %v174, 0.5
  %v241 = vmul.f32 %v179, 0.5
  %v242 = vmul.f32 %v184, 0.5
  %v243 = vmul.f32 %v189, 0.5
  %v244 = vmul.f32 %v194, 0.5
  %v245 = vmul.f32 %v199, 0.5
  %v246 = vmul.f32 %v204, 0.5
  %v247 = vmul.f32 %v209, 0.5
  %v248 = vmul.f32 %v214, 0.5
  %v249 = vmul.f32 %v219, 0.5
  %v250 = vmul.f32 %v224, 0.5
  %v251 = vmul.f32 %v229, 0.5
  %v252 = vmul.f32 %v234, 0.5
  %v253 = vtanh.pop %v237
  %v254 = vtanh.pop %v238
  %v255 = vtanh.pop %v239
  %v256 = vtanh.pop %v240
  %v257 = vtanh.pop %v241
  %v258 = vtanh.pop %v242
  %v259 = vtanh.pop %v243
  %v260 = vtanh.pop %v244
  %v261 = vtanh.pop %v245
  %v262 = vtanh.pop %v246
  %v263 = vtanh.pop %v247
  %v264 = vtanh.pop %v248
  %v265 = vtanh.pop %v249
  %v266 = vtanh.pop %v250
  %v267 = vtanh.pop %v251
  %v268 = vtanh.pop %v252
  %v269 = vadd.f32 %v253, 1.0
  %v270 = vadd.f32 %v254, 1.0
  %v271 = vadd.f32 %v255, 1.0
  %v272 = vadd.f32 %v256, 1.0
  %v273 = vadd.f32 %v257, 1.0
  %v274 = vadd.f32 %v258, 1.0
  %v275 = vadd.f32 %v259, 1.0
  %v276 = vadd.f32 %v260, 1.0
  %v277 = vadd.f32 %v261, 1.0
  %v278 = vadd.f32 %v262, 1.0
  %v279 = vadd.f32 %v263, 1.0
  %v280 = vadd.f32 %v264, 1.0
  %v281 = vadd.f32 %v265, 1.0
  %v282 = vadd.f32 %v266, 1.0
  %v283 = vadd.f32 %v267, 1.0
  %v284 = vadd.f32 %v268, 1.0
  %v285 = vmul.f32 %v269, 0.5
  %v286 = vmul.f32 %v270, 0.5
  %v287 = vmul.f32 %v271, 0.5
  %v288 = vmul.f32 %v272, 0.5
  %v289 = vmul.f32 %v273, 0.5
  %v290 = vmul.f32 %v274, 0.5
  %v291 = vmul.f32 %v275, 0.5
  %v292 = vmul.f32 %v276, 0.5
  %v293 = vmul.f32 %v277, 0.5
  %v294 = vmul.f32 %v278, 0.5
  %v295 = vmul.f32 %v279, 0.5
  %v296 = vmul.f32 %v280, 0.5
  %v297 = vmul.f32 %v281, 0.5
  %v298 = vmul.f32 %v282, 0.5
  %v299 = vmul.f32 %v283, 0.5
  %v300 = vmul.f32 %v284, 0.5
  %vm301 = vcmask 15360
  %302 = vst.msk [vmem:[%s3] sm:$0xff] %vm301, %v285
  %303 = vst.msk [vmem:[%s3 + $0x8] sm:$0xff] %vm301, %v286
  %304 = vst.msk [vmem:[%s3 + $0x10] sm:$0xff] %vm301, %v287
  %305 = vst.msk [vmem:[%s3 + $0x18] sm:$0xff] %vm301, %v288
  %306 = vst.msk [vmem:[%s3 + $0x20] sm:$0xff] %vm301, %v289
  %307 = vst.msk [vmem:[%s3 + $0x28] sm:$0xff] %vm301, %v290
  %308 = vst.msk [vmem:[%s3 + $0x30] sm:$0xff] %vm301, %v291
  %309 = vst.msk [vmem:[%s3 + $0x38] sm:$0xff] %vm301, %v292
  %310 = vst.msk [vmem:[%s3 + $0x40] sm:$0xff] %vm301, %v293
  %311 = vst.msk [vmem:[%s3 + $0x48] sm:$0xff] %vm301, %v294
  %312 = vst.msk [vmem:[%s3 + $0x50] sm:$0xff] %vm301, %v295
  %313 = vst.msk [vmem:[%s3 + $0x58] sm:$0xff] %vm301, %v296
  %314 = vst.msk [vmem:[%s3 + $0x60] sm:$0xff] %vm301, %v297
  %315 = vst.msk [vmem:[%s3 + $0x68] sm:$0xff] %vm301, %v298
  %316 = vst.msk [vmem:[%s3 + $0x70] sm:$0xff] %vm301, %v299
  %317 = vst.msk [vmem:[%s3 + $0x78] sm:$0xff] %vm301, %v300
  // Predicated region
  $region14: #{tpu_custom_call.1} parent=0 // pred_check
    _
  $region15: #{tpu_custom_call.1} parent=0 // pred_check_branch
    %319 = sbr.rel (0) target = $region17
  $region16: #{tpu_custom_call.1} parent=0 // pred_region
    _
  $region17: #{tpu_custom_call.1} parent=0 // pred_fallthru
    _
  // Predicated region
  $region18: #{tpu_custom_call.1} parent=0 // pred_check
    _
  $region19: #{tpu_custom_call.1} parent=0 // pred_check_branch
    %321 = sbr.rel (0) target = $region21
  $region20: #{tpu_custom_call.1} parent=0 // pred_region
    _
  $region21: #{tpu_custom_call.1} parent=0 // pred_fallthru
    _

</llo_original>
